<compile_context>
chip_gen: v7x
topology: tpu7x:2x2x1
jax: 0.10.0
libtpu: 0.0.40
codegen_flags: <defaults>
</compile_context>

<pallas_src>
import functools
import math

import jax
import jax.numpy as jnp
from jax import lax
from jax.experimental import pallas as pl
from jax.experimental.pallas import tpu as pltpu


def _profile_constants(taps, W, present):
    """Compile-time softmax of a deconv'd one-hot row with tap subset `present`.

    Returns (A, p_bg, p) where
      p[k]  = softmax prob at the tap-k column (0.0 if the tap is cropped),
      p_bg  = softmax prob of every background (zero) column,
      A     = sum_j p_t[j] * log_softmax(conv)[j]   (the target-entropy term).
    """
    K = len(taps)
    vals = [float(taps[k]) for k in range(K) if present[k]]
    n_bg = W - len(vals)
    m = max(vals + [0.0])
    s = sum(math.exp(v - m) for v in vals) + n_bg * math.exp(-m)
    log_s = math.log(s)
    p_bg = math.exp(-m) / s
    p = [math.exp(float(taps[k]) - m) / s if present[k] else 0.0 for k in range(K)]
    A = sum(p[k] * (float(taps[k]) - m - log_s) for k in range(K) if present[k])
    A += n_bg * p_bg * (-m - log_s)
    return A, p_bg, tuple(p)


def _make_kernel(start, end, taps):
    """taps: tuple of Python floats (ConvTranspose1d weights), K odd."""
    K = len(taps)
    P = K // 2
    W = end - start + 1
    # TODO(synk): windows narrower than the smoothing kernel (W < K) would need
    # additional cropped-tap profiles; not supported by the constant-folded path.
    assert W >= K

    # One constant set per target "edge profile": interior (all K taps present),
    # P left-edge positions (leading taps cropped), P right-edge positions
    # (trailing taps cropped).  These are exactly the values PyTorch's
    # ConvTranspose1d + LogSoftmax + exp would produce for that row.
    interior = _profile_constants(taps, W, [True] * K)
    left = [_profile_constants(taps, W, [k >= P - e for k in range(K)])
            for e in range(P)]
    right = [_profile_constants(taps, W, [k <= P + e for k in range(K)])
             for e in range(P)]

    def kernel(tgt_ref, x_ref, num_ref):
        t = tgt_ref[...]                                   # (1, T) int32, rows on lanes
        tw = t - start                                     # window position of target
        mask = ((tw >= 0) & (tw <= W - 1)).astype(jnp.float32)   # (1, T)

        # Per-row constants, selected by edge profile (cheap (1, T) selects).
        def per_row(pick):
            v = jnp.full(t.shape, pick(interior), jnp.float32)
            for e in range(P):
                v = jnp.where(tw == e, jnp.float32(pick(left[e])), v)
                v = jnp.where(tw == (W - 1 - e), jnp.float32(pick(right[e])), v)
            return v

        a_row = per_row(lambda c: c[0])                    # sum_j p_t * lsm_t
        pbg_row = per_row(lambda c: c[1])                  # background probability
        pk_row = [per_row(lambda c, k=k: c[2][k]) for k in range(K)]

        # log-softmax of the input logits over the window (sublane) axis.
        xv = x_ref[...].astype(jnp.float32)                # (W, T)
        zx = xv - jnp.max(xv, axis=0, keepdims=True)
        lsm_x = zx - jnp.log(jnp.sum(jnp.exp(zx), axis=0, keepdims=True))

        # Reconstruct p_t = exp(log_softmax(deconv(one_hot))) directly: the
        # background probability everywhere, tap probabilities at the K columns
        # around the target.  Tap positions are disjoint -> overwrite-select.
        # Rows whose target lies outside the window produce finite garbage here
        # and are zeroed by the mask below (same as the all-zero conv row).
        off = lax.broadcasted_iota(jnp.int32, x_ref.shape, 0) - tw      # (W, T)
        p_t = jnp.broadcast_to(pbg_row, x_ref.shape)
        for k in range(K):
            p_t = jnp.where(off == (k - P), pk_row[k], p_t)

        # KLDivLoss(reduction='none', log_target=True), reduced over the window:
        #   sum_j exp(p_t)*(p_t - p_i) = A - sum_j p_t * lsm_x
        kl_row = a_row - jnp.sum(p_t * lsm_x, axis=0, keepdims=True)    # (1, T)
        contrib = mask * kl_row

        # Fold lanes 128-wide: each grid block writes a single (1, 128) partial.
        ncols = contrib.shape[1]
        part = contrib[:, 0:128]
        for i in range(1, ncols // 128):
            part = part + contrib[:, i * 128:(i + 1) * 128]
        num_ref[...] = part

    return kernel


@functools.partial(jax.jit,
                   static_argnames=("kernel_taps", "start", "end", "eps", "max_tile"))
def smooth_kl_conv_loss(x, target, kernel_taps, *, start, end, eps=1e-7,
                        max_tile=16384):
    """kernel_taps must be a tuple of floats (static)."""
    K = len(kernel_taps)
    assert K % 2 == 1, "smoothing kernel length must be odd"
    assert max_tile >= 128 and max_tile % 128 == 0
    N, d, C = x.shape
    W = end - start + 1
    assert W >= K
    R = N * d

    # Rows live on the lane axis.  Use the biggest tile that fits (a (32, 16384)
    # f32 block is ~2 MiB, ~4 MiB double-buffered — well under the scoped VMEM
    # default on v5e/v6e/v7x), but keep at least two grid blocks when possible
    # so v7x's two TensorCores both get work.
    units = pl.cdiv(R, 128)                       # 128-row lane groups
    tile_units = min(max_tile // 128, units)
    if units > 1 and tile_units >= units:
        tile_units = pl.cdiv(units, 2)
    tile = tile_units * 128
    R_pad = pl.cdiv(R, tile) * tile
    nblk = R_pad // tile

    # Glue: static window slice, row flatten, transpose so rows sit on lanes,
    # pad rows with out-of-window targets (mask == 0 -> zero contribution).
    # Kept in the input dtype (bf16 stays bf16); slice/reshape/transpose/pad fuse
    # into one XLA copy and the kernel casts to f32 after the load.
    x_t = lax.slice_in_dim(x, start, end + 1, axis=2).reshape(R, W).T    # (W, R)
    tgt = target.reshape(1, R).astype(jnp.int32)
    if R_pad != R:
        x_t = jnp.pad(x_t, ((0, 0), (0, R_pad - R)))
        tgt = jnp.pad(tgt, ((0, 0), (0, R_pad - R)), constant_values=start - 1)

    num_parts = pl.pallas_call(
        _make_kernel(start, end, kernel_taps),
        out_shape=jax.ShapeDtypeStruct((1, nblk * 128), jnp.float32),
        grid_spec=pltpu.PrefetchScalarGridSpec(
            num_scalar_prefetch=0,
            grid=(nblk,),
            in_specs=[
                pl.BlockSpec((1, tile), lambda i: (0, i)),   # targets, lane-packed
                pl.BlockSpec((W, tile), lambda i: (0, i)),   # sliced logits (W, rows)
            ],
            out_specs=pl.BlockSpec((1, 128), lambda i: (0, i)),  # per-block partials
        ),
        compiler_params=pltpu.CompilerParams(
            dimension_semantics=("parallel",)),   # independent blocks -> megacore OK
    )(tgt, x_t)

    num = jnp.sum(num_parts)
    # Denominator straight from the (un-padded) targets — no second kernel output.
    den = jnp.sum(((target >= start) & (target <= end)).astype(jnp.float32))
    return num / (den + eps)


def reference_loss(x, target, start, end, kernel_weights, eps=1e-7):
    """Pure-JAX reference (deconv of a one-hot == jnp.convolve 'same')."""
    N, d, C = x.shape
    W = end - start + 1
    w = jnp.asarray(kernel_weights, jnp.float32)
    mask = ((target >= start) & (target <= end)).astype(jnp.float32)
    onehot = jax.nn.one_hot(target, C, dtype=jnp.float32)[..., start:end + 1]
    conv = jax.vmap(lambda r: jnp.convolve(r, w, mode="same"))(onehot.reshape(-1, W))
    conv = conv.reshape(N, d, W)
    lsm_t = jax.nn.log_softmax(conv, axis=-1)
    lsm_x = jax.nn.log_softmax(x[..., start:end + 1].astype(jnp.float32), axis=-1)
    kl = jnp.exp(lsm_t) * (lsm_t - lsm_x)
    return jnp.sum(mask[..., None] * kl) / (jnp.sum(mask) + eps)


if __name__ == "__main__":
    key = jax.random.PRNGKey(0)
    kx, kt, kx2, kt2 = jax.random.split(key, 4)

    N, d, C = 2, 16, 48
    start, end = 8, 39                         # window width W = 32
    # Asymmetric taps: catches any conv/deconv flip-convention mismatch.
    smoothing_kernel = (0.05, 0.2, 0.5, 0.15, 0.1)

    x = jax.random.normal(kx, (N, d, C), dtype=jnp.float32)
    target = jax.random.randint(kt, (N, d), 0, C, dtype=jnp.int32)
    # Force coverage of every constant-folded profile: both window edges, the
    # positions just outside the window, and the class-range extremes.
    forced = jnp.array([start, start + 1, end - 1, end,
                        start - 1, end + 1, 0, C - 1], jnp.int32)
    target = target.at[0, :8].set(forced)

    loss = smooth_kl_conv_loss(x, target, smoothing_kernel, start=start, end=end)
    loss = jax.block_until_ready(loss)
    ref = reference_loss(x, target, start, end, smoothing_kernel)
    assert jnp.allclose(loss, ref, rtol=1e-3, atol=1e-5), (loss, ref)

    # Second shape: exercises row padding and a multi-block (nblk >= 2) grid.
    N2, d2 = 4, 80
    x2 = jax.random.normal(kx2, (N2, d2, C), dtype=jnp.float32)
    target2 = jax.random.randint(kt2, (N2, d2), 0, C, dtype=jnp.int32)
    loss2 = smooth_kl_conv_loss(x2, target2, smoothing_kernel, start=start, end=end)
    loss2 = jax.block_until_ready(loss2)
    ref2 = reference_loss(x2, target2, start, end, smoothing_kernel)
    assert jnp.allclose(loss2, ref2, rtol=1e-3, atol=1e-5), (loss2, ref2)

    print("KERNEL_OK")
</pallas_src>

<mosaic_0001>
module attributes {stable_mosaic.version = 11 : i64} {
  func.func @kernel(%arg0: i32, %arg1: memref<1x128xi32, #tpu.memory_space<vmem>>, %arg2: memref<32x128xf32, #tpu.memory_space<vmem>>, %arg3: memref<1x128xf32, #tpu.memory_space<vmem>>) attributes {dimension_semantics = [#tpu.dimension_semantics<parallel>], iteration_bounds = array<i64: 1>, scalar_prefetch = 0 : i64, scratch_operands = 0 : i64, tpu.core_type = #tpu.core_type<tc>, window_params = [{transform_indices = @transform_0, window_bounds = array<i64: 1, 128>}, {transform_indices = @transform_1, window_bounds = array<i64: 32, 128>}, {transform_indices = @transform_2, window_bounds = array<i64: 1, 128>}]} {
    %c0 = arith.constant 0 : index
    %c0_0 = arith.constant 0 : index
    %0 = vector.load %arg1[%c0, %c0_0] : memref<1x128xi32, #tpu.memory_space<vmem>>, vector<1x128xi32>
    %c8_i32 = arith.constant 8 : i32
    %1 = vector.broadcast %c8_i32 : i32 to vector<1x128xi32>
    %2 = arith.subi %0, %1 : vector<1x128xi32>
    %c0_i32 = arith.constant 0 : i32
    %3 = vector.broadcast %c0_i32 : i32 to vector<1x128xi32>
    %4 = arith.cmpi sge, %2, %3 : vector<1x128xi32>
    %c31_i32 = arith.constant 31 : i32
    %5 = vector.broadcast %c31_i32 : i32 to vector<1x128xi32>
    %6 = arith.cmpi sle, %2, %5 : vector<1x128xi32>
    %7 = arith.andi %4, %6 : vector<1x128xi1>
    %8 = arith.extui %7 : vector<1x128xi1> to vector<1x128xi32>
    %9 = arith.sitofp %8 : vector<1x128xi32> to vector<1x128xf32>
    %cst = arith.constant -3.45983624 : f32
    %10 = vector.broadcast %cst : f32 to vector<1x128xf32>
    %c0_i32_1 = arith.constant 0 : i32
    %11 = vector.broadcast %c0_i32_1 : i32 to vector<1x128xi32>
    %12 = arith.cmpi eq, %2, %11 : vector<1x128xi32>
    %cst_2 = arith.constant -3.46025372 : f32
    %13 = vector.broadcast %cst_2 : f32 to vector<1x128xf32>
    %14 = arith.select %12, %13, %10 : vector<1x128xi1>, vector<1x128xf32>
    %c31_i32_3 = arith.constant 31 : i32
    %15 = vector.broadcast %c31_i32_3 : i32 to vector<1x128xi32>
    %16 = arith.cmpi eq, %2, %15 : vector<1x128xi32>
    %cst_4 = arith.constant -3.46006584 : f32
    %17 = vector.broadcast %cst_4 : f32 to vector<1x128xf32>
    %18 = arith.select %16, %17, %14 : vector<1x128xi1>, vector<1x128xf32>
    %c1_i32 = arith.constant 1 : i32
    %19 = vector.broadcast %c1_i32 : i32 to vector<1x128xi32>
    %20 = arith.cmpi eq, %2, %19 : vector<1x128xi32>
    %cst_5 = arith.constant -3.45981097 : f32
    %21 = vector.broadcast %cst_5 : f32 to vector<1x128xf32>
    %22 = arith.select %20, %21, %18 : vector<1x128xi1>, vector<1x128xf32>
    %c30_i32 = arith.constant 30 : i32
    %23 = vector.broadcast %c30_i32 : i32 to vector<1x128xi32>
    %24 = arith.cmpi eq, %2, %23 : vector<1x128xi32>
    %cst_6 = arith.constant -3.45986819 : f32
    %25 = vector.broadcast %cst_6 : f32 to vector<1x128xf32>
    %26 = arith.select %24, %25, %22 : vector<1x128xi1>, vector<1x128xf32>
    %cst_7 = arith.constant 0.0301310085 : f32
    %27 = vector.broadcast %cst_7 : f32 to vector<1x128xf32>
    %c0_i32_8 = arith.constant 0 : i32
    %28 = vector.broadcast %c0_i32_8 : i32 to vector<1x128xi32>
    %29 = arith.cmpi eq, %2, %28 : vector<1x128xi32>
    %cst_9 = arith.constant 0.0303806141 : f32
    %30 = vector.broadcast %cst_9 : f32 to vector<1x128xf32>
    %31 = arith.select %29, %30, %27 : vector<1x128xi1>, vector<1x128xf32>
    %c31_i32_10 = arith.constant 31 : i32
    %32 = vector.broadcast %c31_i32_10 : i32 to vector<1x128xi32>
    %33 = arith.cmpi eq, %2, %32 : vector<1x128xi32>
    %cst_11 = arith.constant 0.0303753838 : f32
    %34 = vector.broadcast %cst_11 : f32 to vector<1x128xf32>
    %35 = arith.select %33, %34, %31 : vector<1x128xi1>, vector<1x128xf32>
    %c1_i32_12 = arith.constant 1 : i32
    %36 = vector.broadcast %c1_i32_12 : i32 to vector<1x128xi32>
    %37 = arith.cmpi eq, %2, %36 : vector<1x128xi32>
    %cst_13 = arith.constant 0.0301776286 : f32
    %38 = vector.broadcast %cst_13 : f32 to vector<1x128xf32>
    %39 = arith.select %37, %38, %35 : vector<1x128xi1>, vector<1x128xf32>
    %c30_i32_14 = arith.constant 30 : i32
    %40 = vector.broadcast %c30_i32_14 : i32 to vector<1x128xi32>
    %41 = arith.cmpi eq, %2, %40 : vector<1x128xi32>
    %cst_15 = arith.constant 0.030226795 : f32
    %42 = vector.broadcast %cst_15 : f32 to vector<1x128xf32>
    %43 = arith.select %41, %42, %39 : vector<1x128xi1>, vector<1x128xf32>
    %cst_16 = arith.constant 0.0316758603 : f32
    %44 = vector.broadcast %cst_16 : f32 to vector<1x128xf32>
    %c0_i32_17 = arith.constant 0 : i32
    %45 = vector.broadcast %c0_i32_17 : i32 to vector<1x128xi32>
    %46 = arith.cmpi eq, %2, %45 : vector<1x128xi32>
    %cst_18 = arith.constant 0.000000e+00 : f32
    %47 = vector.broadcast %cst_18 : f32 to vector<1x128xf32>
    %48 = arith.select %46, %47, %44 : vector<1x128xi1>, vector<1x128xf32>
    %c31_i32_19 = arith.constant 31 : i32
    %49 = vector.broadcast %c31_i32_19 : i32 to vector<1x128xi32>
    %50 = arith.cmpi eq, %2, %49 : vector<1x128xi32>
    %cst_20 = arith.constant 0.0319327638 : f32
    %51 = vector.broadcast %cst_20 : f32 to vector<1x128xf32>
    %52 = arith.select %50, %51, %48 : vector<1x128xi1>, vector<1x128xf32>
    %c1_i32_21 = arith.constant 1 : i32
    %53 = vector.broadcast %c1_i32_21 : i32 to vector<1x128xi32>
    %54 = arith.cmpi eq, %2, %53 : vector<1x128xi32>
    %cst_22 = arith.constant 0.000000e+00 : f32
    %55 = vector.broadcast %cst_22 : f32 to vector<1x128xf32>
    %56 = arith.select %54, %55, %52 : vector<1x128xi1>, vector<1x128xf32>
    %c30_i32_23 = arith.constant 30 : i32
    %57 = vector.broadcast %c30_i32_23 : i32 to vector<1x128xi32>
    %58 = arith.cmpi eq, %2, %57 : vector<1x128xi32>
    %cst_24 = arith.constant 0.0317765549 : f32
    %59 = vector.broadcast %cst_24 : f32 to vector<1x128xf32>
    %60 = arith.select %58, %59, %56 : vector<1x128xi1>, vector<1x128xf32>
    %cst_25 = arith.constant 3.680210e-02 : f32
    %61 = vector.broadcast %cst_25 : f32 to vector<1x128xf32>
    %c0_i32_26 = arith.constant 0 : i32
    %62 = vector.broadcast %c0_i32_26 : i32 to vector<1x128xi32>
    %63 = arith.cmpi eq, %2, %62 : vector<1x128xi32>
    %cst_27 = arith.constant 0.000000e+00 : f32
    %64 = vector.broadcast %cst_27 : f32 to vector<1x128xf32>
    %65 = arith.select %63, %64, %61 : vector<1x128xi1>, vector<1x128xf32>
    %c31_i32_28 = arith.constant 31 : i32
    %66 = vector.broadcast %c31_i32_28 : i32 to vector<1x128xi32>
    %67 = arith.cmpi eq, %2, %66 : vector<1x128xi32>
    %cst_29 = arith.constant 0.0371005759 : f32
    %68 = vector.broadcast %cst_29 : f32 to vector<1x128xf32>
    %69 = arith.select %67, %68, %65 : vector<1x128xi1>, vector<1x128xf32>
    %c1_i32_30 = arith.constant 1 : i32
    %70 = vector.broadcast %c1_i32_30 : i32 to vector<1x128xi32>
    %71 = arith.cmpi eq, %2, %70 : vector<1x128xi32>
    %cst_31 = arith.constant 0.0368590392 : f32
    %72 = vector.broadcast %cst_31 : f32 to vector<1x128xf32>
    %73 = arith.select %71, %72, %69 : vector<1x128xi1>, vector<1x128xf32>
    %c30_i32_32 = arith.constant 30 : i32
    %74 = vector.broadcast %c30_i32_32 : i32 to vector<1x128xi32>
    %75 = arith.cmpi eq, %2, %74 : vector<1x128xi32>
    %cst_33 = arith.constant 0.0369190909 : f32
    %76 = vector.broadcast %cst_33 : f32 to vector<1x128xf32>
    %77 = arith.select %75, %76, %73 : vector<1x128xi1>, vector<1x128xf32>
    %cst_34 = arith.constant 0.0496776365 : f32
    %78 = vector.broadcast %cst_34 : f32 to vector<1x128xf32>
    %c0_i32_35 = arith.constant 0 : i32
    %79 = vector.broadcast %c0_i32_35 : i32 to vector<1x128xi32>
    %80 = arith.cmpi eq, %2, %79 : vector<1x128xi32>
    %cst_36 = arith.constant 0.0500891656 : f32
    %81 = vector.broadcast %cst_36 : f32 to vector<1x128xf32>
    %82 = arith.select %80, %81, %78 : vector<1x128xi1>, vector<1x128xf32>
    %c31_i32_37 = arith.constant 31 : i32
    %83 = vector.broadcast %c31_i32_37 : i32 to vector<1x128xi32>
    %84 = arith.cmpi eq, %2, %83 : vector<1x128xi32>
    %cst_38 = arith.constant 0.0500805415 : f32
    %85 = vector.broadcast %cst_38 : f32 to vector<1x128xf32>
    %86 = arith.select %84, %85, %82 : vector<1x128xi1>, vector<1x128xf32>
    %c1_i32_39 = arith.constant 1 : i32
    %87 = vector.broadcast %c1_i32_39 : i32 to vector<1x128xi32>
    %88 = arith.cmpi eq, %2, %87 : vector<1x128xi32>
    %cst_40 = arith.constant 4.975450e-02 : f32
    %89 = vector.broadcast %cst_40 : f32 to vector<1x128xf32>
    %90 = arith.select %88, %89, %86 : vector<1x128xi1>, vector<1x128xf32>
    %c30_i32_41 = arith.constant 30 : i32
    %91 = vector.broadcast %c30_i32_41 : i32 to vector<1x128xi32>
    %92 = arith.cmpi eq, %2, %91 : vector<1x128xi32>
    %cst_42 = arith.constant 0.049835559 : f32
    %93 = vector.broadcast %cst_42 : f32 to vector<1x128xf32>
    %94 = arith.select %92, %93, %90 : vector<1x128xi1>, vector<1x128xf32>
    %cst_43 = arith.constant 0.0350072384 : f32
    %95 = vector.broadcast %cst_43 : f32 to vector<1x128xf32>
    %c0_i32_44 = arith.constant 0 : i32
    %96 = vector.broadcast %c0_i32_44 : i32 to vector<1x128xi32>
    %97 = arith.cmpi eq, %2, %96 : vector<1x128xi32>
    %cst_45 = arith.constant 0.0352972373 : f32
    %98 = vector.broadcast %cst_45 : f32 to vector<1x128xf32>
    %99 = arith.select %97, %98, %95 : vector<1x128xi1>, vector<1x128xf32>
    %c31_i32_46 = arith.constant 31 : i32
    %100 = vector.broadcast %c31_i32_46 : i32 to vector<1x128xi32>
    %101 = arith.cmpi eq, %2, %100 : vector<1x128xi32>
    %cst_47 = arith.constant 0.000000e+00 : f32
    %102 = vector.broadcast %cst_47 : f32 to vector<1x128xf32>
    %103 = arith.select %101, %102, %99 : vector<1x128xi1>, vector<1x128xf32>
    %c1_i32_48 = arith.constant 1 : i32
    %104 = vector.broadcast %c1_i32_48 : i32 to vector<1x128xi32>
    %105 = arith.cmpi eq, %2, %104 : vector<1x128xi32>
    %cst_49 = arith.constant 0.0350614041 : f32
    %106 = vector.broadcast %cst_49 : f32 to vector<1x128xf32>
    %107 = arith.select %105, %106, %103 : vector<1x128xi1>, vector<1x128xf32>
    %c30_i32_50 = arith.constant 30 : i32
    %108 = vector.broadcast %c30_i32_50 : i32 to vector<1x128xi32>
    %109 = arith.cmpi eq, %2, %108 : vector<1x128xi32>
    %cst_51 = arith.constant 0.035118524 : f32
    %110 = vector.broadcast %cst_51 : f32 to vector<1x128xf32>
    %111 = arith.select %109, %110, %107 : vector<1x128xi1>, vector<1x128xf32>
    %cst_52 = arith.constant 0.0332999155 : f32
    %112 = vector.broadcast %cst_52 : f32 to vector<1x128xf32>
    %c0_i32_53 = arith.constant 0 : i32
    %113 = vector.broadcast %c0_i32_53 : i32 to vector<1x128xi32>
    %114 = arith.cmpi eq, %2, %113 : vector<1x128xi32>
    %cst_54 = arith.constant 0.0335757732 : f32
    %115 = vector.broadcast %cst_54 : f32 to vector<1x128xf32>
    %116 = arith.select %114, %115, %112 : vector<1x128xi1>, vector<1x128xf32>
    %c31_i32_55 = arith.constant 31 : i32
    %117 = vector.broadcast %c31_i32_55 : i32 to vector<1x128xi32>
    %118 = arith.cmpi eq, %2, %117 : vector<1x128xi32>
    %cst_56 = arith.constant 0.000000e+00 : f32
    %119 = vector.broadcast %cst_56 : f32 to vector<1x128xf32>
    %120 = arith.select %118, %119, %116 : vector<1x128xi1>, vector<1x128xf32>
    %c1_i32_57 = arith.constant 1 : i32
    %121 = vector.broadcast %c1_i32_57 : i32 to vector<1x128xi32>
    %122 = arith.cmpi eq, %2, %121 : vector<1x128xi32>
    %cst_58 = arith.constant 0.03335144 : f32
    %123 = vector.broadcast %cst_58 : f32 to vector<1x128xf32>
    %124 = arith.select %122, %123, %120 : vector<1x128xi1>, vector<1x128xf32>
    %c30_i32_59 = arith.constant 30 : i32
    %125 = vector.broadcast %c30_i32_59 : i32 to vector<1x128xi32>
    %126 = arith.cmpi eq, %2, %125 : vector<1x128xi32>
    %cst_60 = arith.constant 0.000000e+00 : f32
    %127 = vector.broadcast %cst_60 : f32 to vector<1x128xf32>
    %128 = arith.select %126, %127, %124 : vector<1x128xi1>, vector<1x128xf32>
    %c0_61 = arith.constant 0 : index
    %c0_62 = arith.constant 0 : index
    %129 = vector.load %arg2[%c0_61, %c0_62] : memref<32x128xf32, #tpu.memory_space<vmem>>, vector<32x128xf32>
    %cst_63 = arith.constant dense<0xFF800000> : vector<128xf32>
    %130 = vector.multi_reduction <maximumf>, %129, %cst_63 [0] : vector<32x128xf32> to vector<128xf32>
    %131 = vector.shape_cast %130 : vector<128xf32> to vector<1x128xf32>
    %132 = vector.broadcast %131 : vector<1x128xf32> to vector<32x128xf32>
    %133 = arith.subf %129, %132 : vector<32x128xf32>
    %134 = math.exp %133 : vector<32x128xf32>
    %cst_64 = arith.constant dense<0.000000e+00> : vector<128xf32>
    %135 = vector.multi_reduction <add>, %134, %cst_64 [0] : vector<32x128xf32> to vector<128xf32>
    %136 = vector.shape_cast %135 : vector<128xf32> to vector<1x128xf32>
    %137 = math.log %136 : vector<1x128xf32>
    %138 = vector.broadcast %137 : vector<1x128xf32> to vector<32x128xf32>
    %139 = arith.subf %133, %138 : vector<32x128xf32>
    %140 = tpu.iota {dimensions = array<i32: 0>} : vector<32x128xi32>
    %141 = vector.broadcast %2 : vector<1x128xi32> to vector<32x128xi32>
    %142 = arith.subi %140, %141 : vector<32x128xi32>
    %143 = vector.shape_cast %43 : vector<1x128xf32> to vector<1x128xf32>
    %144 = vector.broadcast %143 : vector<1x128xf32> to vector<32x128xf32>
    %c-2_i32 = arith.constant -2 : i32
    %145 = vector.broadcast %c-2_i32 : i32 to vector<32x128xi32>
    %146 = arith.cmpi eq, %142, %145 : vector<32x128xi32>
    %147 = vector.shape_cast %60 : vector<1x128xf32> to vector<1x128xf32>
    %148 = vector.broadcast %147 : vector<1x128xf32> to vector<32x128xf32>
    %149 = arith.select %146, %148, %144 : vector<32x128xi1>, vector<32x128xf32>
    %c-1_i32 = arith.constant -1 : i32
    %150 = vector.broadcast %c-1_i32 : i32 to vector<32x128xi32>
    %151 = arith.cmpi eq, %142, %150 : vector<32x128xi32>
    %152 = vector.shape_cast %77 : vector<1x128xf32> to vector<1x128xf32>
    %153 = vector.broadcast %152 : vector<1x128xf32> to vector<32x128xf32>
    %154 = arith.select %151, %153, %149 : vector<32x128xi1>, vector<32x128xf32>
    %c0_i32_65 = arith.constant 0 : i32
    %155 = vector.broadcast %c0_i32_65 : i32 to vector<32x128xi32>
    %156 = arith.cmpi eq, %142, %155 : vector<32x128xi32>
    %157 = vector.shape_cast %94 : vector<1x128xf32> to vector<1x128xf32>
    %158 = vector.broadcast %157 : vector<1x128xf32> to vector<32x128xf32>
    %159 = arith.select %156, %158, %154 : vector<32x128xi1>, vector<32x128xf32>
    %c1_i32_66 = arith.constant 1 : i32
    %160 = vector.broadcast %c1_i32_66 : i32 to vector<32x128xi32>
    %161 = arith.cmpi eq, %142, %160 : vector<32x128xi32>
    %162 = vector.shape_cast %111 : vector<1x128xf32> to vector<1x128xf32>
    %163 = vector.broadcast %162 : vector<1x128xf32> to vector<32x128xf32>
    %164 = arith.select %161, %163, %159 : vector<32x128xi1>, vector<32x128xf32>
    %c2_i32 = arith.constant 2 : i32
    %165 = vector.broadcast %c2_i32 : i32 to vector<32x128xi32>
    %166 = arith.cmpi eq, %142, %165 : vector<32x128xi32>
    %167 = vector.shape_cast %128 : vector<1x128xf32> to vector<1x128xf32>
    %168 = vector.broadcast %167 : vector<1x128xf32> to vector<32x128xf32>
    %169 = arith.select %166, %168, %164 : vector<32x128xi1>, vector<32x128xf32>
    %170 = arith.mulf %169, %139 : vector<32x128xf32>
    %cst_67 = arith.constant dense<0.000000e+00> : vector<128xf32>
    %171 = vector.multi_reduction <add>, %170, %cst_67 [0] : vector<32x128xf32> to vector<128xf32>
    %172 = vector.shape_cast %171 : vector<128xf32> to vector<1x128xf32>
    %173 = arith.subf %26, %172 : vector<1x128xf32>
    %174 = arith.mulf %9, %173 : vector<1x128xf32>
    %c0_68 = arith.constant 0 : index
    %c0_69 = arith.constant 0 : index
    %175 = vector.load %arg3[%c0_68, %c0_69] : memref<1x128xf32, #tpu.memory_space<vmem>>, vector<1x128xf32>
    tpu.vector_store %arg3[%c0_68, %c0_69], %174 {strides = array<i32>} : memref<1x128xf32, #tpu.memory_space<vmem>>, vector<1x128xf32>,
    return
  }
  func.func @transform_0(%arg0: i32) -> (i32, i32) {
    %c0_i32 = arith.constant 0 : i32
    %c0_i32_0 = arith.constant 0 : i32
    return %c0_i32, %arg0 : i32, i32
  }
  func.func @transform_1(%arg0: i32) -> (i32, i32) {
    %c0_i32 = arith.constant 0 : i32
    %c0_i32_0 = arith.constant 0 : i32
    return %c0_i32, %arg0 : i32, i32
  }
  func.func @transform_2(%arg0: i32) -> (i32, i32) {
    %c0_i32 = arith.constant 0 : i32
    %c0_i32_0 = arith.constant 0 : i32
    return %c0_i32, %arg0 : i32, i32
  }
}

</mosaic_0001>

<llo_original>
// kernel: smooth_kl_conv_loss.1
$region0: #{smooth_kl_conv_loss.1}
  #allocation0 [shape = 'u32[]', space=smem, size = 0x4, offset = 0x4, fixed_abs, tag = 'smem constant byte address 0x4 - core index']
  #allocation1 [shape = 'u32[144,128]{1,0:T(1,128)}', space=vmem, size = 0x12000, scoped, tag = 'internal scratch']
  %s0 = inlined_call_operand.vmem [shape: s32[1,128], index: 0, kind: input, shape index: {}]
  %s1 = inlined_call_operand.vmem [shape: f32[32,128], index: 1, kind: input, shape index: {}]
  %s2 = inlined_call_operand.vmem [shape: f32[1,128], index: 2, kind: output, shape index: {}]
  %s3 = sld [smem:[#allocation0]]
  $region18: #{smooth_kl_conv_loss.1} parent=0
    _
  %s5 = ssub.s32 1, %s3
  %s6 = scalar_select 0, %s5, %s3
  // Predicated region
  $region2: #{smooth_kl_conv_loss.1} parent=0 // pred_check
    _
  $region3: #{smooth_kl_conv_loss.1} parent=0 // pred_check_branch
    %8 = sbr.rel (0) target = $region5
  $region4: #{smooth_kl_conv_loss.1} parent=0 // pred_region
    _
  $region5: #{smooth_kl_conv_loss.1} parent=0 // pred_fallthru
    _
  // Predicated region
  $region6: #{smooth_kl_conv_loss.1} parent=0 // pred_check
    _
  $region7: #{smooth_kl_conv_loss.1} parent=0 // pred_check_branch
    %10 = sbr.rel (0) target = $region9
  $region8: #{smooth_kl_conv_loss.1} parent=0 // pred_region
    _
  $region9: #{smooth_kl_conv_loss.1} parent=0 // pred_fallthru
    _
  %v11 = vld [vmem:[%s0] sm:$0x1]
  %v12 = vsub.s32 %v11, 8
  %vm13 = vcmp.ge.s32.totalorder %v12, 0
  %vm14 = vcmp.le.s32.totalorder %v12, 31
  %vm15 = vmand %vm13, %vm14
  %v16 = vsel %vm15, 1, 0
  %v17 = vcvt.s32.f32 %v16
  %vm18 = vcmp.eq.s32.totalorder %v12, 0
  %v19 = vsel %vm18, -3.4602537, -3.4598362
  %vm20 = vcmp.eq.s32.totalorder %v12, 31
  %v21 = vsel %vm20, -3.4600658, %v19
  %vm22 = vcmp.eq.s32.totalorder %v12, 1
  %v23 = vsel %vm22, -3.459811, %v21
  %vm24 = vcmp.eq.s32.totalorder %v12, 30
  %v25 = vsel %vm24, -3.4598682, %v23
  %v26 = vsel %vm18, 0.030380614, 0.030131008
  %v27 = vsel %vm20, 0.030375384, %v26
  %v28 = vsel %vm22, 0.030177629, %v27
  %v29 = vsel %vm24, 0.030226795, %v28
  %v30 = vsel %vm18, 0.0, 0.03167586
  %v31 = vsel %vm20, 0.031932764, %v30
  %v32 = vsel %vm22, 0.0, %v31
  %v33 = vsel %vm24, 0.031776555, %v32
  %v34 = vsel %vm18, 0.0, 0.0368021
  %v35 = vsel %vm20, 0.037100576, %v34
  %v36 = vsel %vm22, 0.03685904, %v35
  %v37 = vsel %vm24, 0.03691909, %v36
  %v38 = vsel %vm18, 0.050089166, 0.049677636
  %v39 = vsel %vm20, 0.05008054, %v38
  %v40 = vsel %vm22, 0.0497545, %v39
  %v41 = vsel %vm24, 0.04983556, %v40
  %v42 = vsel %vm18, 0.035297237, 0.03500724
  %v43 = vsel %vm20, 0.0, %v42
  %v44 = vsel %vm22, 0.035061404, %v43
  %v45 = vsel %vm24, 0.035118524, %v44
  %v46 = vsel %vm18, 0.033575773, 0.033299915
  %v47 = vsel %vm20, 0.0, %v46
  %v48 = vsel %vm22, 0.03335144, %v47
  %v49 = vsel %vm24, 0.0, %v48
  %v50 = vld [vmem:[%s1] sm:$0xff]
  %v51 = vld [vmem:[%s1 + $0x8] sm:$0xff]
  %v52 = vld [vmem:[%s1 + $0x10] sm:$0xff]
  %v53 = vld [vmem:[%s1 + $0x18] sm:$0xff]
  %v54 = vmax.f32 %v50, %v51
  %v55 = vmax.f32 %v52, %v53
  %v56 = vmax.f32 %v54, %v55
  %v57 = vrot.slane %v56, 4
  %v58 = vmax.f32 %v56, %v57
  %v59 = vrot.slane %v58, 2
  %v60 = vmax.f32 %v58, %v59
  %v61 = vrot.slane %v60, 1
  %v62 = vmax.f32 %v60, %v61
  %v63 = vsub.f32 %v50, %v62
  %v64 = vsub.f32 %v51, %v62
  %v65 = vsub.f32 %v52, %v62
  %v66 = vsub.f32 %v53, %v62
  %v67 = vmul.f32 %v63, 1.442695
  %v68 = vpow.pop %v67
  %v69 = vmul.f32 %v64, 1.442695
  %v70 = vpow.pop %v69
  %v71 = vmul.f32 %v65, 1.442695
  %v72 = vpow.pop %v71
  %v73 = vmul.f32 %v66, 1.442695
  %v74 = vpow.pop %v73
  %v75 = vadd.f32 %v68, %v70
  %v76 = vadd.f32 %v75, %v72
  %v77 = vadd.f32 %v76, %v74
  %v78 = vrot.slane %v77, 4
  %v79 = vadd.f32 %v77, %v78
  %v80 = vrot.slane %v79, 2
  %v81 = vadd.f32 %v79, %v80
  %v82 = vrot.slane %v81, 1
  %v83 = vadd.f32 %v81, %v82
  %v84 = vlog2.pop %v83
  %v85 = vmul.f32 %v84, 0.6931472
  %v86 = vsub.f32 %v63, %v85
  %v87 = vsub.f32 %v64, %v85
  %v88 = vsub.f32 %v65, %v85
  %v89 = vsub.f32 %v66, %v85
  %v90 = vlaneseq
  %v91 = vshrl.u32 %v90, 7
  %v92 = vadd.s32 %v91, 8
  %v93 = vadd.s32 %v91, 16
  %v94 = vadd.s32 %v91, 24
  %v95 = vlaneseq
  %v96 = vshrl.u32 %v95, 7
  %v97 = vsub.s32 0, %v96
  %v98 = vrot.slane %v12, %v97
  %v99 = vsub.s32 %v91, %v98
  %v100 = vsub.s32 %v92, %v98
  %v101 = vsub.s32 %v93, %v98
  %v102 = vsub.s32 %v94, %v98
  %v104 = vlaneseq
  %v105 = vshrl.u32 %v104, 7
  %v106 = vsub.s32 0, %v105
  %v107 = vrot.slane %v29, %v106
  %vm109 = vcmp.eq.s32.totalorder %v99, 4294967294
  %vm110 = vcmp.eq.s32.totalorder %v100, 4294967294
  %vm111 = vcmp.eq.s32.totalorder %v101, 4294967294
  %vm112 = vcmp.eq.s32.totalorder %v102, 4294967294
  %v114 = vlaneseq
  %v115 = vshrl.u32 %v114, 7
  %v116 = vsub.s32 0, %v115
  %v117 = vrot.slane %v33, %v116
  %v119 = vsel %vm109, %v117, %v107
  %v120 = vsel %vm110, %v117, %v107
  %v121 = vsel %vm111, %v117, %v107
  %v122 = vsel %vm112, %v117, %v107
  %vm123 = vcmp.eq.s32.totalorder %v99, 4294967295
  %vm124 = vcmp.eq.s32.totalorder %v100, 4294967295
  %vm125 = vcmp.eq.s32.totalorder %v101, 4294967295
  %vm126 = vcmp.eq.s32.totalorder %v102, 4294967295
  %v128 = vlaneseq
  %v129 = vshrl.u32 %v128, 7
  %v130 = vsub.s32 0, %v129
  %v131 = vrot.slane %v37, %v130
  %v133 = vsel %vm123, %v131, %v119
  %v134 = vsel %vm124, %v131, %v120
  %v135 = vsel %vm125, %v131, %v121
  %v136 = vsel %vm126, %v131, %v122
  %vm137 = vcmp.eq.s32.totalorder %v99, 0
  %vm138 = vcmp.eq.s32.totalorder %v100, 0
  %vm139 = vcmp.eq.s32.totalorder %v101, 0
  %vm140 = vcmp.eq.s32.totalorder %v102, 0
  %v142 = vlaneseq
  %v143 = vshrl.u32 %v142, 7
  %v144 = vsub.s32 0, %v143
  %v145 = vrot.slane %v41, %v144
  %v147 = vsel %vm137, %v145, %v133
  %v148 = vsel %vm138, %v145, %v134
  %v149 = vsel %vm139, %v145, %v135
  %v150 = vsel %vm140, %v145, %v136
  %vm151 = vcmp.eq.s32.totalorder %v99, 1
  %vm152 = vcmp.eq.s32.totalorder %v100, 1
  %vm153 = vcmp.eq.s32.totalorder %v101, 1
  %vm154 = vcmp.eq.s32.totalorder %v102, 1
  %v156 = vlaneseq
  %v157 = vshrl.u32 %v156, 7
  %v158 = vsub.s32 0, %v157
  %v159 = vrot.slane %v45, %v158
  %v161 = vsel %vm151, %v159, %v147
  %v162 = vsel %vm152, %v159, %v148
  %v163 = vsel %vm153, %v159, %v149
  %v164 = vsel %vm154, %v159, %v150
  %vm165 = vcmp.eq.s32.totalorder %v99, 2
  %vm166 = vcmp.eq.s32.totalorder %v100, 2
  %vm167 = vcmp.eq.s32.totalorder %v101, 2
  %vm168 = vcmp.eq.s32.totalorder %v102, 2
  %v170 = vlaneseq
  %v171 = vshrl.u32 %v170, 7
  %v172 = vsub.s32 0, %v171
  %v173 = vrot.slane %v49, %v172
  %v175 = vsel %vm165, %v173, %v161
  %v176 = vsel %vm166, %v173, %v162
  %v177 = vsel %vm167, %v173, %v163
  %v178 = vsel %vm168, %v173, %v164
  %v179 = vmul.f32 %v175, %v86
  %v180 = vmul.f32 %v176, %v87
  %v181 = vmul.f32 %v177, %v88
  %v182 = vmul.f32 %v178, %v89
  %v183 = vadd.f32 %v179, %v180
  %v184 = vadd.f32 %v183, %v181
  %v185 = vadd.f32 %v184, %v182
  %v186 = vrot.slane %v185, 4
  %v187 = vadd.f32 %v185, %v186
  %v188 = vrot.slane %v187, 2
  %v189 = vadd.f32 %v187, %v188
  %v190 = vrot.slane %v189, 1
  %v191 = vadd.f32 %v189, %v190
  %v192 = vsub.f32 %v25, %v191
  %v193 = vmul.f32 %v17, %v192
  %194 = vst [vmem:[%s2] sm:$0x1] %v193
  // Predicated region
  $region10: #{smooth_kl_conv_loss.1} parent=0 // pred_check
    _
  $region11: #{smooth_kl_conv_loss.1} parent=0 // pred_check_branch
    %196 = sbr.rel (0) target = $region13
  $region12: #{smooth_kl_conv_loss.1} parent=0 // pred_region
    _
  $region13: #{smooth_kl_conv_loss.1} parent=0 // pred_fallthru
    _
  // Predicated region
  $region14: #{smooth_kl_conv_loss.1} parent=0 // pred_check
    _
  $region15: #{smooth_kl_conv_loss.1} parent=0 // pred_check_branch
    %198 = sbr.rel (0) target = $region17
  $region16: #{smooth_kl_conv_loss.1} parent=0 // pred_region
    _
  $region17: #{smooth_kl_conv_loss.1} parent=0 // pred_fallthru
    _

</llo_original>
